<compile_context>
chip_gen: v7x
topology: tpu7x:2x2x1
jax: 0.10.0
libtpu: 0.0.40
codegen_flags: <defaults>
</compile_context>

<pallas_src>
import functools

import jax
import jax.numpy as jnp
from jax.experimental import pallas as pl
from jax.experimental.pallas import tpu as pltpu


def _round_up(n, m):
    return ((n + m - 1) // m) * m


def _gate_kernel(x_ref, w_ref, o_ref, *, tn, mm_dtype):
    """One (row-tile, output-column-tile): out = (x @ w) * sigmoid(x)."""
    j = pl.program_id(0)                       # output-column tile index
    x = x_ref[...]                             # (TM, Dp) activation row tile
    # Single fused GEMM on the MXU, f32 accumulation. Operands in mm_dtype
    # (bf16 weight -> full-rate MXU); the cast is cheap VPU work hidden under
    # the matmul.
    proj = jnp.dot(x.astype(mm_dtype), w_ref[...],
                   preferred_element_type=jnp.float32)
    # Gate = sigmoid of the *input* columns matching this output tile, in the
    # original activation precision (EUP work, also hidden under the matmul).
    if tn == x_ref.shape[-1]:
        xg = x
    else:
        col = pl.multiple_of(j * tn, 128)
        xg = x_ref[:, pl.ds(col, tn)]
    gate = jax.nn.sigmoid(xg.astype(jnp.float32))
    o_ref[...] = (proj * gate).astype(o_ref.dtype)


def _pick_tn(dp, mm_bytes, budget_bytes):
    """Largest output-column tile (multiple of 128, divisor of dp) whose
    (dp, tn) weight slab fits the per-core VMEM budget."""
    tn = dp
    while tn > 128 and dp * tn * mm_bytes > budget_bytes:
        half = tn // 2
        if half % 128 != 0 or dp % half != 0:
            break
        tn = half
    return tn


@functools.partial(jax.jit, static_argnames=("block_rows", "weight_vmem_budget"))
def gate_forward(x, w, *, block_rows=512, weight_vmem_budget=12 * 1024 * 1024):
    """Gate forward: (x @ w) * sigmoid(x).

    x: (..., D)  activations.
    w: (D, D)    linear weight, pre-transposed (in_features, out_features),
                 i.e. torch_weight.T, so y = x @ w == F.linear(x, torch_weight).
                 Pass w in bf16 for full-rate MXU (accumulation stays f32).
    """
    orig_shape = x.shape
    D = orig_shape[-1]
    x2 = x.reshape(-1, D)
    M = x2.shape[0]

    LANE, SUB = 128, 8
    Dp = _round_up(D, LANE)

    # Fast path: when D is already lane-dense there are NO pad copies and NO
    # output slice. Only the ragged-D case pays for padding.
    if Dp != D:
        # TODO(synk): hoist the weight padding to init time if D is not a
        # multiple of 128 in real configs (it is rebuilt per call here).
        x2 = jnp.zeros((M, Dp), x2.dtype).at[:, :D].set(x2)
        w = jnp.zeros((Dp, Dp), w.dtype).at[:D, :D].set(w)

    mm_dtype = w.dtype                      # MXU operand dtype follows weight
    mm_bytes = jnp.dtype(mm_dtype).itemsize
    x_bytes = jnp.dtype(x.dtype).itemsize

    # Row tile: no row padding; ragged last block handled by a cdiv grid.
    block_rows = max(SUB, _round_up(block_rows, SUB))
    TM = block_rows if M >= block_rows else M   # full-dim block when M small
    n_rows = pl.cdiv(M, TM)

    # Output-column tile keeps the resident weight slab within the per-core
    # VMEM budget (v7x has only 64 MiB per TensorCore, duplicated per core).
    TN = _pick_tn(Dp, mm_bytes, weight_vmem_budget)
    n_cols = Dp // TN

    # Column axis OUTER so each weight slab is fetched from HBM exactly once;
    # single-buffer it when its block index is constant (n_cols == 1).
    w_buffers = 1 if n_cols == 1 else 2
    w_spec = pl.BlockSpec((Dp, TN), lambda j, i: (0, j),
                          pipeline_mode=pl.Buffered(w_buffers))

    vmem_bytes = (w_buffers * Dp * TN * mm_bytes   # resident weight slab(s)
                  + 2 * TM * Dp * x_bytes          # double-buffered x tiles
                  + 2 * TM * TN * x_bytes          # double-buffered out tiles
                  + (4 << 20))                     # slack for internal scratch
    vmem_limit = int(min(max(vmem_bytes, 16 << 20), 100 << 20))

    cost = pl.CostEstimate(
        flops=2 * M * D * D,
        transcendentals=M * D,
        bytes_accessed=(n_cols * M * Dp * x_bytes   # x reads
                        + Dp * Dp * mm_bytes        # weight read (once)
                        + M * Dp * x_bytes),        # output write
    )

    out = pl.pallas_call(
        functools.partial(_gate_kernel, tn=TN, mm_dtype=mm_dtype),
        out_shape=jax.ShapeDtypeStruct((M, Dp), x.dtype),
        grid=(n_cols, n_rows),
        in_specs=[
            # Activation row tile: streamed / double-buffered along rows.
            pl.BlockSpec((TM, Dp), lambda j, i: (i, 0)),
            # Weight column slab: VMEM-resident across the inner row loop.
            w_spec,
        ],
        out_specs=pl.BlockSpec((TM, TN), lambda j, i: (i, j)),
        compiler_params=pltpu.CompilerParams(
            dimension_semantics=("parallel", "parallel"),
            vmem_limit_bytes=vmem_limit,
        ),
        cost_estimate=cost,
    )(x2, w)

    if Dp != D:
        out = out[:, :D]
    return out.reshape(orig_shape)


def gate_reference(x, w):
    # Plain-JAX reference mirroring the PyTorch module exactly:
    #   x_proj = Linear(x) ; gate = sigmoid(x) ; out = x_proj * gate
    return (x @ w) * jax.nn.sigmoid(x)


def init_params(key, input_size, dtype=jnp.float32):
    # nn.Linear(input, input, bias=False): weight (out, in), U(-1/sqrt(in), 1/sqrt(in)).
    bound = 1.0 / (input_size ** 0.5)
    w_torch = jax.random.uniform(
        key, (input_size, input_size), jnp.float32, -bound, bound)
    return w_torch.T.astype(dtype)  # store pre-transposed (in, out)


if __name__ == "__main__":
    key = jax.random.PRNGKey(0)
    k1, k2, k3, k4, k5, k6 = jax.random.split(key, 6)
    batch, seq_len = 2, 8

    # ---- Case 1: ragged feature dim (D=32 -> padded to 128), f32 ----------
    dim = 32
    x = jax.random.normal(k1, (batch, seq_len, dim), jnp.float32)
    w = init_params(k2, dim, jnp.float32)
    out = jax.block_until_ready(gate_forward(x, w))
    ref = gate_reference(x, w)
    assert out.shape == ref.shape and out.dtype == ref.dtype
    assert jnp.allclose(out, ref, atol=1e-5, rtol=1e-5)

    # ---- Case 2: lane-dense fast path, bf16 activations + bf16 weight -----
    dim2 = 128
    x2 = jax.random.normal(k3, (batch, seq_len, dim2), jnp.float32).astype(jnp.bfloat16)
    w2 = init_params(k4, dim2, jnp.bfloat16)
    out2 = jax.block_until_ready(gate_forward(x2, w2))
    assert out2.shape == (batch, seq_len, dim2) and out2.dtype == jnp.bfloat16
    ref2 = gate_reference(x2.astype(jnp.float32), w2.astype(jnp.float32))
    assert jnp.allclose(out2.astype(jnp.float32), ref2, atol=5e-2, rtol=5e-2)

    # ---- Case 3: force output-column (N) tiling with a tiny weight budget --
    dim3 = 256
    x3 = jax.random.normal(k5, (batch, seq_len, dim3), jnp.float32)
    w3 = init_params(k6, dim3, jnp.float32)
    out3 = jax.block_until_ready(
        gate_forward(x3, w3, weight_vmem_budget=256 * 128 * 4))
    ref3 = gate_reference(x3, w3)
    assert jnp.allclose(out3, ref3, atol=1e-5, rtol=1e-5)

    print("KERNEL_OK")
</pallas_src>

<mosaic_0001>
module attributes {stable_mosaic.version = 11 : i64} {
  func.func @_gate_kernel(%arg0: i32, %arg1: i32, %arg2: memref<16x128xf32, #tpu.memory_space<vmem>>, %arg3: memref<128x128xf32, #tpu.memory_space<vmem>>, %arg4: memref<16x128xf32, #tpu.memory_space<vmem>>) attributes {dimension_semantics = [#tpu.dimension_semantics<parallel>, #tpu.dimension_semantics<parallel>], iteration_bounds = array<i64: 1, 1>, scalar_prefetch = 0 : i64, scratch_operands = 0 : i64, tpu.core_type = #tpu.core_type<tc>, window_params = [{transform_indices = @transform_0, window_bounds = array<i64: 16, 128>}, {pipeline_mode = #tpu.pipeline_mode<synchronous>, transform_indices = @transform_1, window_bounds = array<i64: 128, 128>}, {transform_indices = @transform_2, window_bounds = array<i64: 16, 128>}]} {
    %c0 = arith.constant 0 : index
    %c0_0 = arith.constant 0 : index
    %0 = vector.load %arg2[%c0, %c0_0] : memref<16x128xf32, #tpu.memory_space<vmem>>, vector<16x128xf32>
    %c0_1 = arith.constant 0 : index
    %c0_2 = arith.constant 0 : index
    %1 = vector.load %arg3[%c0_1, %c0_2] : memref<128x128xf32, #tpu.memory_space<vmem>>, vector<128x128xf32>
    %cst = arith.constant dense<0.000000e+00> : vector<16x128xf32>
    %2 = tpu.matmul %0, %1, %cst {dimension_numbers = #tpu.dot_dimension_numbers<[1], [0], [0], [1], [0, 0, 1, 1], [], []>} : vector<16x128xf32>, vector<128x128xf32>, vector<16x128xf32> -> vector<16x128xf32>
    %3 = arith.negf %0 : vector<16x128xf32>
    %4 = math.exp %3 : vector<16x128xf32>
    %cst_3 = arith.constant 1.000000e+00 : f32
    %5 = vector.broadcast %cst_3 : f32 to vector<16x128xf32>
    %6 = arith.addf %5, %4 : vector<16x128xf32>
    %7 = arith.divf %5, %6 : vector<16x128xf32>
    %8 = arith.mulf %2, %7 : vector<16x128xf32>
    %c0_4 = arith.constant 0 : index
    %c0_5 = arith.constant 0 : index
    %9 = vector.load %arg4[%c0_4, %c0_5] : memref<16x128xf32, #tpu.memory_space<vmem>>, vector<16x128xf32>
    tpu.vector_store %arg4[%c0_4, %c0_5], %8 {strides = array<i32>} : memref<16x128xf32, #tpu.memory_space<vmem>>, vector<16x128xf32>,
    return
  }
  func.func @transform_0(%arg0: i32, %arg1: i32) -> (i32, i32) {
    %c0_i32 = arith.constant 0 : i32
    %c0_i32_0 = arith.constant 0 : i32
    return %arg1, %c0_i32 : i32, i32
  }
  func.func @transform_1(%arg0: i32, %arg1: i32) -> (i32, i32) {
    %c0_i32 = arith.constant 0 : i32
    %c0_i32_0 = arith.constant 0 : i32
    return %c0_i32, %arg0 : i32, i32
  }
  func.func @transform_2(%arg0: i32, %arg1: i32) -> (i32, i32) {
    %c0_i32 = arith.constant 0 : i32
    return %arg1, %arg0 : i32, i32
  }
}

</mosaic_0001>

<llo_original>
// kernel: gate_forward.1
$region0: #{gate_forward.1}
  #allocation0 [shape = 'u32[]', space=smem, size = 0x4, offset = 0x4, fixed_abs, tag = 'smem constant byte address 0x4 - core index']
  #allocation1 [shape = 'u32[144,128]{1,0:T(1,128)}', space=vmem, size = 0x12000, scoped, tag = 'internal scratch']
  %s0 = inlined_call_operand.vmem [shape: f32[16,128], index: 0, kind: input, shape index: {}]
  %s1 = inlined_call_operand.vmem [shape: f32[128,128], index: 1, kind: input, shape index: {}]
  %s2 = inlined_call_operand.vmem [shape: f32[16,128], index: 2, kind: output, shape index: {}]
  %s3 = sld [smem:[#allocation0]]
  $region18: #{gate_forward.1} parent=0
    _
  %s5 = ssub.s32 1, %s3
  %s6 = scalar_select 0, %s5, %s3
  // Predicated region
  $region2: #{gate_forward.1} parent=0 // pred_check
    _
  $region3: #{gate_forward.1} parent=0 // pred_check_branch
    %8 = sbr.rel (0) target = $region5
  $region4: #{gate_forward.1} parent=0 // pred_region
    _
  $region5: #{gate_forward.1} parent=0 // pred_fallthru
    _
  // Predicated region
  $region6: #{gate_forward.1} parent=0 // pred_check
    _
  $region7: #{gate_forward.1} parent=0 // pred_check_branch
    %10 = sbr.rel (0) target = $region9
  $region8: #{gate_forward.1} parent=0 // pred_region
    _
  $region9: #{gate_forward.1} parent=0 // pred_fallthru
    _
  %v11 = vld [vmem:[%s0] sm:$0xff]
  %v12 = vld [vmem:[%s0 + $0x8] sm:$0xff]
  %v13 = vld [vmem:[%s1] sm:$0xff]
  %v14 = vld [vmem:[%s1 + $0x8] sm:$0xff]
  %v15 = vld [vmem:[%s1 + $0x10] sm:$0xff]
  %v16 = vld [vmem:[%s1 + $0x18] sm:$0xff]
  %v17 = vld [vmem:[%s1 + $0x20] sm:$0xff]
  %v18 = vld [vmem:[%s1 + $0x28] sm:$0xff]
  %v19 = vld [vmem:[%s1 + $0x30] sm:$0xff]
  %v20 = vld [vmem:[%s1 + $0x38] sm:$0xff]
  %v21 = vld [vmem:[%s1 + $0x40] sm:$0xff]
  %v22 = vld [vmem:[%s1 + $0x48] sm:$0xff]
  %v23 = vld [vmem:[%s1 + $0x50] sm:$0xff]
  %v24 = vld [vmem:[%s1 + $0x58] sm:$0xff]
  %v25 = vld [vmem:[%s1 + $0x60] sm:$0xff]
  %v26 = vld [vmem:[%s1 + $0x68] sm:$0xff]
  %v27 = vld [vmem:[%s1 + $0x70] sm:$0xff]
  %v28 = vld [vmem:[%s1 + $0x78] sm:$0xff]
  %29 = vmatprep.subr.mxu0 0.0
  %30 = vmatpush1.msra.mxu0 %v13
  %31 = vmatprep.subr.mxu0 0.0
  %32 = vmatpush1.msra.mxu0 %v14
  %33 = vmatprep.subr.mxu0 0.0
  %34 = vmatpush1.msra.mxu0 %v15
  %35 = vmatprep.subr.mxu0 0.0
  %36 = vmatpush1.msra.mxu0 %v16
  %37 = vmatprep.subr.mxu0 0.0
  %38 = vmatpush1.msra.mxu0 %v17
  %39 = vmatprep.subr.mxu0 0.0
  %40 = vmatpush1.msra.mxu0 %v18
  %41 = vmatprep.subr.mxu0 0.0
  %42 = vmatpush1.msra.mxu0 %v19
  %43 = vmatprep.subr.mxu0 0.0
  %44 = vmatpush1.msra.mxu0 %v20
  %45 = vmatprep.subr.mxu0 0.0
  %46 = vmatpush1.msra.mxu0 %v21
  %47 = vmatprep.subr.mxu0 0.0
  %48 = vmatpush1.msra.mxu0 %v22
  %49 = vmatprep.subr.mxu0 0.0
  %50 = vmatpush1.msra.mxu0 %v23
  %51 = vmatprep.subr.mxu0 0.0
  %52 = vmatpush1.msra.mxu0 %v24
  %53 = vmatprep.subr.mxu0 0.0
  %54 = vmatpush1.msra.mxu0 %v25
  %55 = vmatprep.subr.mxu0 0.0
  %56 = vmatpush1.msra.mxu0 %v26
  %57 = vmatprep.subr.mxu0 0.0
  %58 = vmatpush1.msra.mxu0 %v27
  %59 = vmatprep.subr.mxu0 0.0
  %60 = vmatpush1.msra.mxu0 %v28
  %61 = vmatprep.subr.mxu0 0.0
  %62 = vmatpush1.msra.mxu0 0.0
  %63 = vmatprep.subr.mxu0 0.0
  %64 = vmatpush1.msra.mxu0 0.0
  %65 = vmatprep.subr.mxu0 0.0
  %66 = vmatpush1.msra.mxu0 0.0
  %67 = vmatprep.subr.mxu0 0.0
  %68 = vmatpush1.msra.mxu0 0.0
  %69 = vmatprep.subr.mxu0 0.0
  %70 = vmatpush1.msra.mxu0 0.0
  %71 = vmatprep.subr.mxu0 0.0
  %72 = vmatpush1.msra.mxu0 0.0
  %73 = vmatprep.subr.mxu0 0.0
  %74 = vmatpush1.msra.mxu0 0.0
  %75 = vmatprep.subr.mxu0 0.0
  %76 = vmatpush1.msra.mxu0 0.0
  %77 = vmatprep.subr.mxu0 0.0
  %78 = vmatpush1.msra.mxu0 0.0
  %79 = vmatprep.subr.mxu0 0.0
  %80 = vmatpush1.msra.mxu0 0.0
  %81 = vmatprep.subr.mxu0 0.0
  %82 = vmatpush1.msra.mxu0 0.0
  %83 = vmatprep.subr.mxu0 0.0
  %84 = vmatpush1.msra.mxu0 0.0
  %85 = vmatprep.subr.mxu0 0.0
  %86 = vmatpush1.msra.mxu0 0.0
  %87 = vmatprep.subr.mxu0 0.0
  %88 = vmatpush1.msra.mxu0 0.0
  %89 = vmatprep.subr.mxu0 0.0
  %90 = vmatpush1.msra.mxu0 0.0
  %91 = vmatprep.subr.mxu0 0.0
  %92 = vmatpush1.msra.mxu0 0.0
  %93 = vmatprep.mubr.f32.mxu0 0.0
  %94 = vmatmul.mubr.f32.gmra.mrb[0].mxu0 %v11
  %v95 = vpop.f32.mrb[0].mxu0
  %v96 = vadd.f32 0.0, %v95
  %v97 = vpop.f32.mrb[0].mxu0
  %98 = vmatprep.mubr.f32.mxu0 0.0
  %99 = vmatmul.mubr.f32.gmra.mrb[0].mxu0 %v12
  %v100 = vpop.f32.mrb[0].mxu0
  %v101 = vadd.f32 0.0, %v100
  %v102 = vpop.f32.mrb[0].mxu0
  %103 = vdwg.mxu0
  %v104 = vxor.u32 %v11, 2147483648
  %v105 = vxor.u32 %v12, 2147483648
  %v106 = vmul.f32 %v104, 1.442695
  %v107 = vpow.pop %v106
  %v108 = vmul.f32 %v105, 1.442695
  %v109 = vpow.pop %v108
  %v110 = vadd.f32 %v107, 1.0
  %v111 = vadd.f32 %v109, 1.0
  %v112 = vrcp.pop %v110
  %v113 = vmul.f32 1.0, %v112
  %v114 = vrcp.pop %v111
  %v115 = vmul.f32 1.0, %v114
  %v116 = vmul.f32 %v96, %v113
  %v117 = vmul.f32 %v101, %v115
  %118 = vst [vmem:[%s2] sm:$0xff] %v116
  %119 = vst [vmem:[%s2 + $0x8] sm:$0xff] %v117
  // Predicated region
  $region10: #{gate_forward.1} parent=0 // pred_check
    _
  $region11: #{gate_forward.1} parent=0 // pred_check_branch
    %121 = sbr.rel (0) target = $region13
  $region12: #{gate_forward.1} parent=0 // pred_region
    _
  $region13: #{gate_forward.1} parent=0 // pred_fallthru
    _
  // Predicated region
  $region14: #{gate_forward.1} parent=0 // pred_check
    _
  $region15: #{gate_forward.1} parent=0 // pred_check_branch
    %123 = sbr.rel (0) target = $region17
  $region16: #{gate_forward.1} parent=0 // pred_region
    _
  $region17: #{gate_forward.1} parent=0 // pred_fallthru
    _

</llo_original>
